<compile_context>
chip_gen: v5e
topology: v5e:2x2
jax: 0.10.0
libtpu: 0.0.40
codegen_flags: <defaults>
</compile_context>

<pallas_src>
import functools

import jax
import jax.numpy as jnp
from jax.experimental import pallas as pl
from jax.experimental.pallas import tpu as pltpu


def _ntxent_row_block_kernel(diss_ref, diag_ref, y_col_ref, y_row_ref, out_ref, *,
                             inv_temp, size, block_rows):
    """One (block_rows, size) row slab of the dissimilarity matrix -> scalar partial loss."""
    i = pl.program_id(0)
    tb, s = diss_ref.shape  # static block shape

    # Temperature scale + per-row max shift (cancels exactly in the log ratio).
    x = diss_ref[...].astype(jnp.float32) * inv_temp                      # (TB, S)
    m = jnp.max(x, axis=1, keepdims=True)                                 # (TB, 1)  XLU
    e = jnp.exp(x - m)                                                    # (TB, S)  EUP

    # Diagonal term, same shift: exp(diss[i,i]/T - m_i).
    e_diag = jnp.exp(diag_ref[...].astype(jnp.float32) * inv_temp - m)    # (TB, 1)

    # Positive sum includes the diagonal (same label by construction); subtract it.
    same_label = y_col_ref[...] == y_row_ref[...]                         # (TB,1)==(1,S) -> (TB,S)
    pos_sum = jnp.sum(jnp.where(same_label, e, 0.0), axis=1, keepdims=True)  # (TB, 1)
    row_sum = jnp.sum(e, axis=1, keepdims=True)                              # (TB, 1)

    nominator = pos_sum - e_diag
    denominator = row_sum - e_diag

    # -log(nominator / denominator); the max shift cancels.
    loss_rows = jnp.log(denominator) - jnp.log(nominator)                 # (TB, 1)

    # Zero-out rows past `size` (last block may be padded), then reduce to a
    # single scalar per grid step (lane-dense tiny output, no (TB,1) vst.msk).
    valid = (i * block_rows
             + jax.lax.broadcasted_iota(jnp.int32, (tb, 1), 0)) < size
    out_ref[...] = jnp.sum(jnp.where(valid, loss_rows, 0.0),
                           axis=(0, 1), keepdims=True)                    # (1, 1)


def _vmem_capacity_bytes():
    """Trace-time VMEM capacity; conservative (v7x per-TC) fallback."""
    try:
        return int(pltpu.get_tpu_info().vmem_capacity_bytes)
    except Exception:
        return 64 * 1024 * 1024


def _choose_block_rows(size, bytes_per_elem, vmem_bytes):
    """Rows per grid step: big enough to amortize per-step overhead, small
    enough that a double-buffered (rows, size) slab of `diss` fits the
    generation-appropriate per-buffer budget."""
    if vmem_bytes >= 100 * 1024 * 1024:      # v5e / v6e: 128 MiB physical VMEM
        tile_budget_bytes = 16 * 1024 * 1024
    else:                                     # v7x: 64 MiB per TensorCore
        tile_budget_bytes = 6 * 1024 * 1024
    rows = tile_budget_bytes // max(bytes_per_elem * size, 1)
    rows = max(8, (rows // 8) * 8)
    rows = min(rows, 2048)
    padded_size = -(-size // 8) * 8
    return min(rows, padded_size)


def dissimilarity_ntxent_loss(diss, y, temperature=0.5, block_rows=None,
                              stream_bf16=False):
    """diss: [S, S] dissimilarity matrix (S = 2 * len(y)); y: [S//2] int labels.

    stream_bf16=True streams `diss` from HBM as bfloat16 (math stays f32 in
    the kernel); use when bit-exact f32 parity with the torch reference is
    not required (halves HBM traffic on the mem-bound v5e/v6e path).
    """
    diss = jnp.asarray(diss)
    size = diss.shape[0]
    assert diss.shape == (size, size), "diss must be square"

    stream_dtype = jnp.bfloat16 if stream_bf16 else jnp.float32
    diss_s = diss.astype(stream_dtype)

    # O(S) diagonal extraction on the wrapper side (replaces full-slab iota masks).
    diag_col = jnp.diagonal(diss_s).astype(jnp.float32).reshape(size, 1)   # (S, 1)

    y = jnp.asarray(y, jnp.int32).reshape(-1)
    assert 2 * y.shape[0] == size, "module implies diss is (2N, 2N) for labels of length N"
    y_cat = jnp.concatenate([y, y], axis=0)                                # (S,)
    y_col = y_cat.reshape(size, 1)                                         # block-row labels
    y_row = y_cat.reshape(1, size)                                         # all labels, resident

    vmem_bytes = _vmem_capacity_bytes()
    if block_rows is not None:
        tb = max(8, (block_rows // 8) * 8)
    else:
        tb = _choose_block_rows(size, jnp.dtype(stream_dtype).itemsize, vmem_bytes)
    g = pl.cdiv(size, tb)

    vmem_limit = (64 * 1024 * 1024 if vmem_bytes >= 100 * 1024 * 1024
                  else 32 * 1024 * 1024)

    kernel = functools.partial(
        _ntxent_row_block_kernel,
        inv_temp=float(1.0 / temperature),
        size=size,
        block_rows=tb,
    )

    partial_sums = pl.pallas_call(
        kernel,
        out_shape=jax.ShapeDtypeStruct((g, 1, 1), jnp.float32),
        grid=(g,),
        in_specs=[
            # diss: stream (TB, S) row slabs, auto double-buffered
            pl.BlockSpec((tb, size), lambda i: (i, 0)),
            # diagonal values for the rows of this block
            pl.BlockSpec((tb, 1), lambda i: (i, 0)),
            # labels for the rows of this block
            pl.BlockSpec((tb, 1), lambda i: (i, 0)),
            # full label row: constant index_map -> fetched once, stays resident
            pl.BlockSpec((1, size), lambda i: (0, 0)),
        ],
        # leading grid dim squeezed; per-step scalar partial loss
        out_specs=pl.BlockSpec((None, 1, 1), lambda i: (i, 0, 0)),
        compiler_params=pltpu.CompilerParams(
            dimension_semantics=("parallel",),   # megacore-shardable; no-op on 1-TC chips
            vmem_limit_bytes=vmem_limit,
        ),
    )(diss_s, diag_col, y_col, y_row)

    # Tiny wrapper-side combine (g floats); padded rows contributed 0.
    return jnp.sum(partial_sums) / size


def reference_loss(diss, y, temperature=0.5):
    """Pure-JAX transcription of the torch module, for correctness checking."""
    size = diss.shape[0]
    y_cat = jnp.concatenate([y, y], axis=0)
    eye = jnp.eye(size, dtype=bool)
    pos_mask = (y_cat[:, None] == y_cat[None, :]) & (~eye)
    neg_mask = (~eye).astype(jnp.float32)
    e = jnp.exp(diss / temperature)
    nominator = jnp.sum(pos_mask.astype(jnp.float32) * e, axis=1)
    denominator = jnp.sum(neg_mask * e, axis=1)
    return jnp.mean(-jnp.log(nominator / denominator))


if __name__ == "__main__":
    key = jax.random.PRNGKey(0)
    k_d, k_y = jax.random.split(key)

    n_labels = 8                       # batch of labels
    size = 2 * n_labels                # diss is (16, 16)
    temperature = 0.5

    # 3 classes; after cat([y, y]) every label appears >= twice, so every row
    # has at least one positive and the loss is finite (as the module assumes).
    y = jax.random.randint(k_y, (n_labels,), 0, 3, dtype=jnp.int32)
    diss = jax.random.normal(k_d, (size, size), jnp.float32)

    # block_rows=8 to exercise a 2-step grid at this small size.
    loss = dissimilarity_ntxent_loss(diss, y, temperature=temperature, block_rows=8)
    loss = jax.block_until_ready(loss)

    ref = reference_loss(diss, y, temperature)
    assert loss.shape == ()
    assert bool(jnp.isfinite(loss))
    assert jnp.allclose(loss, ref, atol=1e-5, rtol=1e-5), (loss, ref)

    # Exercise the bf16-streaming fast path (mem-bound v5e/v6e optimization).
    loss_bf16 = dissimilarity_ntxent_loss(diss, y, temperature=temperature,
                                          block_rows=8, stream_bf16=True)
    loss_bf16 = jax.block_until_ready(loss_bf16)
    assert bool(jnp.isfinite(loss_bf16))

    print("KERNEL_OK")
</pallas_src>

<mosaic_0001>
module attributes {stable_mosaic.version = 11 : i64} {
  func.func @_ntxent_row_block_kernel(%arg0: i32, %arg1: memref<8x16xf32, #tpu.memory_space<vmem>>, %arg2: memref<8x1xf32, #tpu.memory_space<vmem>>, %arg3: memref<8x1xi32, #tpu.memory_space<vmem>>, %arg4: memref<1x16xi32, #tpu.memory_space<vmem>>, %arg5: memref<1x1x1xf32, #tpu.memory_space<vmem>>) attributes {dimension_semantics = [#tpu.dimension_semantics<parallel>], iteration_bounds = array<i64: 2>, scalar_prefetch = 0 : i64, scratch_operands = 0 : i64, tpu.core_type = #tpu.core_type<tc>, window_params = [{transform_indices = @transform_0, window_bounds = array<i64: 8, 16>}, {transform_indices = @transform_1, window_bounds = array<i64: 8, 1>}, {transform_indices = @transform_2, window_bounds = array<i64: 8, 1>}, {pipeline_mode = #tpu.pipeline_mode<synchronous>, transform_indices = @transform_3, window_bounds = array<i64: 1, 16>}, {transform_indices = @transform_4, window_bounds = array<i64: 1, 1, 1>}]} {
    %c0 = arith.constant 0 : index
    %c0_0 = arith.constant 0 : index
    %0 = vector.load %arg1[%c0, %c0_0] : memref<8x16xf32, #tpu.memory_space<vmem>>, vector<8x16xf32>
    %cst = arith.constant 2.000000e+00 : f32
    %1 = vector.broadcast %cst : f32 to vector<8x16xf32>
    %2 = arith.mulf %0, %1 : vector<8x16xf32>
    %cst_1 = arith.constant dense<0xFF800000> : vector<8xf32>
    %3 = vector.multi_reduction <maximumf>, %2, %cst_1 [1] : vector<8x16xf32> to vector<8xf32>
    %4 = vector.shape_cast %3 : vector<8xf32> to vector<8x1xf32>
    %5 = vector.broadcast %4 : vector<8x1xf32> to vector<8x16xf32>
    %6 = arith.subf %2, %5 : vector<8x16xf32>
    %7 = math.exp %6 : vector<8x16xf32>
    %c0_2 = arith.constant 0 : index
    %c0_3 = arith.constant 0 : index
    %8 = vector.load %arg2[%c0_2, %c0_3] : memref<8x1xf32, #tpu.memory_space<vmem>>, vector<8x1xf32>
    %cst_4 = arith.constant 2.000000e+00 : f32
    %9 = vector.broadcast %cst_4 : f32 to vector<8x1xf32>
    %10 = arith.mulf %8, %9 : vector<8x1xf32>
    %11 = arith.subf %10, %4 : vector<8x1xf32>
    %12 = math.exp %11 : vector<8x1xf32>
    %c0_5 = arith.constant 0 : index
    %c0_6 = arith.constant 0 : index
    %13 = vector.load %arg3[%c0_5, %c0_6] : memref<8x1xi32, #tpu.memory_space<vmem>>, vector<8x1xi32>
    %c0_7 = arith.constant 0 : index
    %c0_8 = arith.constant 0 : index
    %14 = vector.load %arg4[%c0_7, %c0_8] : memref<1x16xi32, #tpu.memory_space<vmem>>, vector<1x16xi32>
    %15 = vector.broadcast %13 : vector<8x1xi32> to vector<8x16xi32>
    %16 = vector.broadcast %14 : vector<1x16xi32> to vector<8x16xi32>
    %17 = arith.cmpi eq, %15, %16 : vector<8x16xi32>
    %cst_9 = arith.constant 0.000000e+00 : f32
    %18 = vector.broadcast %cst_9 : f32 to vector<8x16xf32>
    %19 = arith.select %17, %7, %18 : vector<8x16xi1>, vector<8x16xf32>
    %cst_10 = arith.constant dense<0.000000e+00> : vector<8xf32>
    %20 = vector.multi_reduction <add>, %19, %cst_10 [1] : vector<8x16xf32> to vector<8xf32>
    %21 = vector.shape_cast %20 : vector<8xf32> to vector<8x1xf32>
    %cst_11 = arith.constant dense<0.000000e+00> : vector<8xf32>
    %22 = vector.multi_reduction <add>, %7, %cst_11 [1] : vector<8x16xf32> to vector<8xf32>
    %23 = vector.shape_cast %22 : vector<8xf32> to vector<8x1xf32>
    %24 = arith.subf %21, %12 : vector<8x1xf32>
    %25 = arith.subf %23, %12 : vector<8x1xf32>
    %26 = math.log %25 : vector<8x1xf32>
    %27 = math.log %24 : vector<8x1xf32>
    %28 = arith.subf %26, %27 : vector<8x1xf32>
    %c8_i32 = arith.constant 8 : i32
    %29 = arith.muli %arg0, %c8_i32 : i32
    %30 = tpu.iota {dimensions = array<i32: 0>} : vector<8x1xi32>
    %31 = vector.broadcast %29 : i32 to vector<8x1xi32>
    %32 = arith.addi %31, %30 : vector<8x1xi32>
    %c16_i32 = arith.constant 16 : i32
    %33 = vector.broadcast %c16_i32 : i32 to vector<8x1xi32>
    %34 = arith.cmpi slt, %32, %33 : vector<8x1xi32>
    %cst_12 = arith.constant 0.000000e+00 : f32
    %35 = vector.broadcast %cst_12 : f32 to vector<8x1xf32>
    %36 = arith.select %34, %28, %35 : vector<8x1xi1>, vector<8x1xf32>
    %37 = vector.shape_cast %36 : vector<8x1xf32> to vector<1x8x1xf32>
    %cst_13 = arith.constant dense<0.000000e+00> : vector<1xf32>
    %38 = vector.multi_reduction <add>, %37, %cst_13 [1, 2] : vector<1x8x1xf32> to vector<1xf32>
    %39 = vector.shape_cast %38 : vector<1xf32> to vector<1x1x1xf32>
    %40 = vector.extract %39[0, 0, 0] : f32 from vector<1x1x1xf32>
    %41 = vector.broadcast %40 : f32 to vector<1x1xf32>
    %c0_14 = arith.constant 0 : index
    %c0_15 = arith.constant 0 : index
    %c0_16 = arith.constant 0 : index
    %42 = vector.load %arg5[%c0_14, %c0_15, %c0_16] : memref<1x1x1xf32, #tpu.memory_space<vmem>>, vector<1x1x1xf32>
    %43 = vector.shape_cast %42 : vector<1x1x1xf32> to vector<1x1xf32>
    %44 = vector.shape_cast %41 : vector<1x1xf32> to vector<1x1x1xf32>
    tpu.vector_store %arg5[%c0_14, %c0_15, %c0_16], %44 {strides = array<i32>} : memref<1x1x1xf32, #tpu.memory_space<vmem>>, vector<1x1x1xf32>,
    return
  }
  func.func @transform_0(%arg0: i32) -> (i32, i32) {
    %c0_i32 = arith.constant 0 : i32
    %c0_i32_0 = arith.constant 0 : i32
    return %arg0, %c0_i32 : i32, i32
  }
  func.func @transform_1(%arg0: i32) -> (i32, i32) {
    %c0_i32 = arith.constant 0 : i32
    %c0_i32_0 = arith.constant 0 : i32
    return %arg0, %c0_i32 : i32, i32
  }
  func.func @transform_2(%arg0: i32) -> (i32, i32) {
    %c0_i32 = arith.constant 0 : i32
    %c0_i32_0 = arith.constant 0 : i32
    return %arg0, %c0_i32 : i32, i32
  }
  func.func @transform_3(%arg0: i32) -> (i32, i32) {
    %c0_i32 = arith.constant 0 : i32
    %c0_i32_0 = arith.constant 0 : i32
    %c0_i32_1 = arith.constant 0 : i32
    return %c0_i32, %c0_i32_0 : i32, i32
  }
  func.func @transform_4(%arg0: i32) -> (i32, i32, i32) {
    %c0_i32 = arith.constant 0 : i32
    %c0_i32_0 = arith.constant 0 : i32
    %c0_i32_1 = arith.constant 0 : i32
    return %arg0, %c0_i32, %c0_i32_0 : i32, i32, i32
  }
}

</mosaic_0001>

<llo_original>
// kernel: tpu_custom_call.1
$region0: #{tpu_custom_call.1}
  #allocation0 [shape = 'u32[]', space=smem, size = 0x4, offset = 0x4, fixed_abs, tag = 'smem constant byte address 0x4 - core index']
  #allocation1 [shape = 'u32[72,128]{1,0:T(1,128)}', space=vmem, size = 0x9000, scoped, tag = 'internal scratch']
  %s0 = inlined_call_operand.vmem [shape: f32[16,16], index: 0, kind: input, shape index: {}]
  %s1 = inlined_call_operand.vmem [shape: f32[16,1], index: 1, kind: input, shape index: {}]
  %s2 = inlined_call_operand.vmem [shape: s32[16,1], index: 2, kind: input, shape index: {}]
  %s3 = inlined_call_operand.vmem [shape: s32[1,16], index: 3, kind: input, shape index: {}]
  %s4 = inlined_call_operand.vmem [shape: f32[2,1,1], index: 4, kind: output, shape index: {}]
  %s5 = sld [smem:[#allocation0]]
  $region49: #{tpu_custom_call.1} parent=0
    _
  %s7 = ssub.s32 1, %s5
  %s8 = scalar_select 0, %s7, %s5
  loop: start=0, step=1, limit=4
  $region2: #{tpu_custom_call.1} parent=0 // loop_pre_header
    _
  $region3: #{tpu_custom_call.1} parent=0 // loop_header
    %s10 = sphi 0, %s14
    %p11 = scmp.ge.s32.totalorder %s10, 4
    %s20 = sphi 0, %s22
    %s23 = sphi 0, %s20
    %s24 = sphi 0, %s23
    %s40 = sphi 0, %s24
    %s46 = sphi 0, %s48
    %s49 = sphi 0, %s46
    %s50 = sphi 0, %s49
    %s66 = sphi 0, %s50
    %s72 = sphi 0, %s74
    %s75 = sphi 0, %s72
    %s76 = sphi 0, %s75
    %s92 = sphi 0, %s76
    %s96 = sphi 0, %s96
    %s98 = sphi 0, %s96
    %s99 = sphi 0, %s98
    %s113 = sphi 0, %s99
    %s119 = sphi 0, %s121
    %s122 = sphi 0, %s119
    %s123 = sphi 0, %s122
    %s139 = sphi 0, %s123
  $region4: #{tpu_custom_call.1} parent=0 // loop_header_branch
    %13 = sbr.rel (%p11) target = $region8
  $region5: #{tpu_custom_call.1} parent=0 // loop_body
    %s15 = ssub.s32 %s10, 1
    %s16 = ssub.s32 %s10, 2
    %s17 = sadd.s32 %s10, 1
    %s18 = ssub.s32 %s10, %s17
    %p19 = scmp.eq.s32.totalorder %s18, 0
    %s21 = sadd.s32 %s20, 1
    %s22 = scalar_select %p19, %s20, %s21
    %p25 = pneg %p19
    %p26 = scmp.eq.s32.totalorder %s10, 1
    %p27 = por %p25, %p26
    %p28 = scmp.ne.s32.totalorder %s20, %s23
    %p29 = scmp.eq.s32.totalorder %s10, 0
    %p30 = por %p28, %p29
    %p31 = scmp.ne.s32.totalorder %s20, %s23
    %p32 = scmp.eq.s32.totalorder %s15, 1
    %p33 = por %p31, %p32
    %p34 = scmp.ne.s32.totalorder %s23, %s24
    %p35 = scmp.eq.s32.totalorder %s15, 0
    %p36 = por %p34, %p35
    %p37 = scmp.ne.s32.totalorder %s23, %s24
    %p38 = scmp.eq.s32.totalorder %s16, 1
    %p39 = por %p37, %p38
    %p41 = scmp.ne.s32.totalorder %s24, %s40
    %p42 = scmp.eq.s32.totalorder %s16, 0
    %p43 = por %p41, %p42
    %s44 = ssub.s32 %s10, %s17
    %p45 = scmp.eq.s32.totalorder %s44, 0
    %s47 = sadd.s32 %s46, 1
    %s48 = scalar_select %p45, %s46, %s47
    %p51 = pneg %p45
    %p52 = scmp.eq.s32.totalorder %s10, 1
    %p53 = por %p51, %p52
    %p54 = scmp.ne.s32.totalorder %s46, %s49
    %p55 = scmp.eq.s32.totalorder %s10, 0
    %p56 = por %p54, %p55
    %p57 = scmp.ne.s32.totalorder %s46, %s49
    %p58 = scmp.eq.s32.totalorder %s15, 1
    %p59 = por %p57, %p58
    %p60 = scmp.ne.s32.totalorder %s49, %s50
    %p61 = scmp.eq.s32.totalorder %s15, 0
    %p62 = por %p60, %p61
    %p63 = scmp.ne.s32.totalorder %s49, %s50
    %p64 = scmp.eq.s32.totalorder %s16, 1
    %p65 = por %p63, %p64
    %p67 = scmp.ne.s32.totalorder %s50, %s66
    %p68 = scmp.eq.s32.totalorder %s16, 0
    %p69 = por %p67, %p68
    %s70 = ssub.s32 %s10, %s17
    %p71 = scmp.eq.s32.totalorder %s70, 0
    %s73 = sadd.s32 %s72, 1
    %s74 = scalar_select %p71, %s72, %s73
    %p77 = pneg %p71
    %p78 = scmp.eq.s32.totalorder %s10, 1
    %p79 = por %p77, %p78
    %p80 = scmp.ne.s32.totalorder %s72, %s75
    %p81 = scmp.eq.s32.totalorder %s10, 0
    %p82 = por %p80, %p81
    %p83 = scmp.ne.s32.totalorder %s72, %s75
    %p84 = scmp.eq.s32.totalorder %s15, 1
    %p85 = por %p83, %p84
    %p86 = scmp.ne.s32.totalorder %s75, %s76
    %p87 = scmp.eq.s32.totalorder %s15, 0
    %p88 = por %p86, %p87
    %p89 = scmp.ne.s32.totalorder %s75, %s76
    %p90 = scmp.eq.s32.totalorder %s16, 1
    %p91 = por %p89, %p90
    %p93 = scmp.ne.s32.totalorder %s76, %s92
    %p94 = scmp.eq.s32.totalorder %s16, 0
    %p95 = por %p93, %p94
    %s97 = sadd.s32 %s96, 1
    %p100 = scmp.eq.s32.totalorder %s10, 1
    %p101 = scmp.ne.s32.totalorder %s96, %s98
    %p102 = scmp.eq.s32.totalorder %s10, 0
    %p103 = por %p101, %p102
    %p104 = scmp.ne.s32.totalorder %s96, %s98
    %p105 = scmp.eq.s32.totalorder %s15, 1
    %p106 = por %p104, %p105
    %p107 = scmp.ne.s32.totalorder %s98, %s99
    %p108 = scmp.eq.s32.totalorder %s15, 0
    %p109 = por %p107, %p108
    %p110 = scmp.ne.s32.totalorder %s98, %s99
    %p111 = scmp.eq.s32.totalorder %s16, 1
    %p112 = por %p110, %p111
    %p114 = scmp.ne.s32.totalorder %s99, %s113
    %p115 = scmp.eq.s32.totalorder %s16, 0
    %p116 = por %p114, %p115
    %s117 = ssub.s32 %s10, %s17
    %p118 = scmp.eq.s32.totalorder %s117, 0
    %s120 = sadd.s32 %s119, 1
    %s121 = scalar_select %p118, %s119, %s120
    %p124 = pneg %p118
    %p125 = scmp.eq.s32.totalorder %s10, 1
    %p126 = por %p124, %p125
    %p127 = scmp.ne.s32.totalorder %s119, %s122
    %p128 = scmp.eq.s32.totalorder %s10, 0
    %p129 = por %p127, %p128
    %p130 = scmp.ne.s32.totalorder %s119, %s122
    %p131 = scmp.eq.s32.totalorder %s15, 1
    %p132 = por %p130, %p131
    %p133 = scmp.ne.s32.totalorder %s122, %s123
    %p134 = scmp.eq.s32.totalorder %s15, 0
    %p135 = por %p133, %p134
    %p136 = scmp.ne.s32.totalorder %s122, %s123
    %p137 = scmp.eq.s32.totalorder %s16, 1
    %p138 = por %p136, %p137
    %p140 = scmp.ne.s32.totalorder %s123, %s139
    %p141 = scmp.eq.s32.totalorder %s16, 0
    %p142 = por %p140, %p141
    %p143 = scmp.le.s32.totalorder 1, %s10
    %p144 = scmp.lt.s32.totalorder %s10, 3
    %p145 = pnand %p143, %p144
    %p146 = pneg %p145
    // Predicated region
    $region9: #{tpu_custom_call.1} parent=5 // pred_check
      _
    $region10: #{tpu_custom_call.1} parent=5 // pred_check_branch
      %148 = sbr.rel (%p145) target = $region12
    $region11: #{tpu_custom_call.1} parent=5 // pred_region
      %s149 = ssub.s32 %s10, 1
      // Predicated region
      $region13: #{tpu_custom_call.1} parent=11 // pred_check
        %p150 = pneg %p109
      $region14: #{tpu_custom_call.1} parent=11 // pred_check_branch
        %152 = sbr.rel (%p150) target = $region16
      $region15: #{tpu_custom_call.1} parent=11 // pred_region
        _
      $region16: #{tpu_custom_call.1} parent=11 // pred_fallthru
        _
    $region12: #{tpu_custom_call.1} parent=5 // pred_fallthru
      _
    %p153 = scmp.lt.s32.totalorder %s10, 2
    // Predicated region
    $region17: #{tpu_custom_call.1} parent=5 // pred_check
      %p154 = pneg %p153
    $region18: #{tpu_custom_call.1} parent=5 // pred_check_branch
      %156 = sbr.rel (%p154) target = $region20
    $region19: #{tpu_custom_call.1} parent=5 // pred_region
      // Predicated region
      $region21: #{tpu_custom_call.1} parent=19 // pred_check
        %p157 = pneg %p30
      $region22: #{tpu_custom_call.1} parent=19 // pred_check_branch
        %159 = sbr.rel (%p157) target = $region24
      $region23: #{tpu_custom_call.1} parent=19 // pred_region
        %p160 = scmp.lt.s32.totalorder %s10, 1
        %s161 = scalar_select %p160, %s10, 1
        %s162 = smul.addr %s161, 8
        %s163 = scalar_lea.vmem %s0, %s162
      $region24: #{tpu_custom_call.1} parent=19 // pred_fallthru
        _
      // Predicated region
      $region25: #{tpu_custom_call.1} parent=19 // pred_check
        %p164 = pneg %p56
      $region26: #{tpu_custom_call.1} parent=19 // pred_check_branch
        %166 = sbr.rel (%p164) target = $region28
      $region27: #{tpu_custom_call.1} parent=19 // pred_region
        %p167 = scmp.lt.s32.totalorder %s10, 1
        %s168 = scalar_select %p167, %s10, 1
        %s169 = smul.addr %s168, 8
        %s170 = scalar_lea.vmem %s1, %s169
      $region28: #{tpu_custom_call.1} parent=19 // pred_fallthru
        _
      // Predicated region
      $region29: #{tpu_custom_call.1} parent=19 // pred_check
        %p171 = pneg %p82
      $region30: #{tpu_custom_call.1} parent=19 // pred_check_branch
        %173 = sbr.rel (%p171) target = $region32
      $region31: #{tpu_custom_call.1} parent=19 // pred_region
        %p174 = scmp.lt.s32.totalorder %s10, 1
        %s175 = scalar_select %p174, %s10, 1
        %s176 = smul.addr %s175, 8
        %s177 = scalar_lea.vmem %s2, %s176
      $region32: #{tpu_custom_call.1} parent=19 // pred_fallthru
        _
    $region20: #{tpu_custom_call.1} parent=5 // pred_fallthru
      _
    %p178 = scmp.le.s32.totalorder 1, %s10
    %p179 = scmp.lt.s32.totalorder %s10, 3
    %p180 = pnand %p178, %p179
    %p181 = pneg %p180
    // Predicated region
    $region33: #{tpu_custom_call.1} parent=5 // pred_check
      _
    $region34: #{tpu_custom_call.1} parent=5 // pred_check_branch
      %183 = sbr.rel (%p180) target = $region36
    $region35: #{tpu_custom_call.1} parent=5 // pred_region
      %s184 = ssub.s32 %s10, 1
      %p185 = scmp.lt.s32.totalorder %s15, 1
      %s186 = scalar_select %p185, %s15, 1
      %s187 = smul.addr %s186, 8
      %s188 = scalar_lea.vmem %s0, %s187
      %p189 = pneg %p36
      %p190 = pneg %p33
      %p191 = scmp.lt.s32.totalorder %s15, 1
      %s192 = scalar_select %p191, %s15, 1
      %s193 = smul.addr %s192, 8
      %s194 = scalar_lea.vmem %s1, %s193
      %p195 = pneg %p62
      %p196 = pneg %p59
      %p197 = scmp.lt.s32.totalorder %s15, 1
      %s198 = scalar_select %p197, %s15, 1
      %s199 = smul.addr %s198, 8
      %s200 = scalar_lea.vmem %s2, %s199
      %p201 = pneg %p88
      %p202 = pneg %p85
      %p203 = pneg %p109
      %p204 = pneg %p106
      %p205 = pneg %p135
      %p206 = pneg %p132
      %p207 = scmp.lt.s32.totalorder %s15, 1
      %s208 = scalar_select %p207, %s15, 1
      %s209 = scalar_lea.vmem %s4, %s208
      %p210 = scmp.lt.s32.totalorder %s15, 1
      %s211 = scalar_select %p210, %s15, 1
      %s212 = smul.addr %s211, 8
      %s213 = scalar_lea.vmem %s0, %s212
      %p214 = scmp.lt.s32.totalorder %s15, 1
      %s215 = scalar_select %p214, %s15, 1
      %s216 = smul.addr %s215, 8
      %s217 = scalar_lea.vmem %s1, %s216
      %p218 = scmp.lt.s32.totalorder %s15, 1
      %s219 = scalar_select %p218, %s15, 1
      %s220 = smul.addr %s219, 8
      %s221 = scalar_lea.vmem %s2, %s220
      %p222 = scmp.lt.s32.totalorder %s15, 1
      %s223 = scalar_select %p222, %s15, 1
      %s224 = scalar_lea.vmem %s4, %s223
      %v225 = vld [vmem:[%s213] sm:$0xff]
      %v226 = vmul.f32 %v225, 2.0
      %vm227 = vcmask 130048
      %v228 = vsel %vm227, %v226, -inf
      %229 = vmax.xlane.f32.xlu0 %v228
      %v230 = vpop.xlane.xlu0 %229
      %v231 = vsub.f32 %v226, %v230
      %v232 = vmul.f32 %v231, 1.442695
      %v233 = vpow.pop %v232
      %v234 = vld [vmem:[%s217] sm:$0xff]
      %v235 = vmul.f32 %v234, 2.0
      %v236 = vsub.f32 %v235, %v230
      %v237 = vmul.f32 %v236, 1.442695
      %v238 = vpow.pop %v237
      %v239 = vld [vmem:[%s221] sm:$0xff]
      %v240 = vld [vmem:[%s3] sm:$0x1]
      %241 = vset.pattern.permute.xlu0 0
      %242 = vperm.xlu0 %241, %v239
      %v243 = vpop.permute.xlu0 %242
      %v244 = vperm.slane %v240, 0
      %vm245 = vcmp.eq.s32.totalorder %v243, %v244
      %v246 = vsel %vm245, %v233, 0.0
      %v247 = vsel %vm227, %v246, 0.0
      %248 = vadd.xlane.f32.xlu0 %v247
      %v249 = vpop.xlane.xlu0 %248
      %v250 = vsel %vm227, %v233, 0.0
      %251 = vadd.xlane.f32.xlu0 %v250
      %v252 = vpop.xlane.xlu0 %251
      %v253 = vsub.f32 %v249, %v238
      %v254 = vsub.f32 %v252, %v238
      %v255 = vlog2.pop %v254
      %v256 = vmul.f32 %v255, 0.6931472
      %v257 = vlog2.pop %v253
      %v258 = vmul.f32 %v257, 0.6931472
      %v259 = vsub.f32 %v256, %v258
      %s260 = smul.u32 %s15, 8
      %v261 = vlaneseq
      %v262 = vshrl.u32 %v261, 7
      %v263 = vstv %s260
      %v264 = vadd.s32 %v263, %v262
      %vm265 = vcmp.lt.s32.totalorder %v264, 16
      %v266 = vsel %vm265, %v259, 0.0
      %vm267 = vcmask 7168
      %v268 = vsel %vm267, %v266, 0.0
      %269 = vadd.xlane.f32.xlu0 %v268
      %v270 = vpop.xlane.xlu0 %269
      %v271 = vrot.slane %v270, 4
      %v272 = vadd.f32 %v270, %v271
      %v273 = vrot.slane %v272, 2
      %v274 = vadd.f32 %v272, %v273
      %v275 = vrot.slane %v274, 1
      %v276 = vadd.f32 %v274, %v275
      %s277 = vtos %v276
      %v278 = vstv %s277
      %vm279 = vcmask 0
      %280 = vst.msk [vmem:[%s224] sm:$0x1] %vm279, %v278
      %p281 = scmp.lt.s32.totalorder %s15, 1
      %s282 = scalar_select %p281, %s15, 1
      %s283 = scalar_lea.vmem %s4, %s282
      // Predicated region
      $region37: #{tpu_custom_call.1} parent=35 // pred_check
        %p284 = pneg %p132
      $region38: #{tpu_custom_call.1} parent=35 // pred_check_branch
        %286 = sbr.rel (%p284) target = $region40
      $region39: #{tpu_custom_call.1} parent=35 // pred_region
        _
      $region40: #{tpu_custom_call.1} parent=35 // pred_fallthru
        _
    $region36: #{tpu_custom_call.1} parent=5 // pred_fallthru
      _
    %p287 = scmp.le.s32.totalorder 2, %s10
    // Predicated region
    $region41: #{tpu_custom_call.1} parent=5 // pred_check
      %p288 = pneg %p287
    $region42: #{tpu_custom_call.1} parent=5 // pred_check_branch
      %290 = sbr.rel (%p288) target = $region44
    $region43: #{tpu_custom_call.1} parent=5 // pred_region
      %s291 = ssub.s32 %s10, 2
      // Predicated region
      $region45: #{tpu_custom_call.1} parent=43 // pred_check
        %p292 = pneg %p138
      $region46: #{tpu_custom_call.1} parent=43 // pred_check_branch
        %294 = sbr.rel (%p292) target = $region48
      $region47: #{tpu_custom_call.1} parent=43 // pred_region
        %p295 = scmp.lt.s32.totalorder %s16, 1
        %s296 = scalar_select %p295, %s16, 1
        %s297 = scalar_lea.vmem %s4, %s296
      $region48: #{tpu_custom_call.1} parent=43 // pred_fallthru
        _
    $region44: #{tpu_custom_call.1} parent=5 // pred_fallthru
      _
  $region6: #{tpu_custom_call.1} parent=0 // loop_footer
    %s14 = sadd.s32 1, %s10
  $region7: #{tpu_custom_call.1} parent=0 // loop_footer_branch
    %9 = sbr.rel target = $region3
  $region8: #{tpu_custom_call.1} parent=0 // loop_exit
    _

</llo_original>
